<compile_context>
chip_gen: v6e
topology: v6e:2x2x1
jax: 0.10.0
libtpu: 0.0.40
codegen_flags: <defaults>
</compile_context>

<pallas_src>
import functools

import jax
import jax.numpy as jnp
from jax.experimental import pallas as pl
from jax.experimental.pallas import tpu as pltpu


def _round_up(x, m):
    return (x + m - 1) // m * m


def maxout_kernel(x_ref, w_ref, b_ref, o_ref):
    # x_ref: (TB, K)   w_ref: (P, K, TO)   b_ref: (P, 1, TO)   o_ref: (TB, TO)
    x = x_ref[...]
    num_pieces = w_ref.shape[0]
    acc = jnp.dot(x, w_ref[0], preferred_element_type=jnp.float32) + b_ref[0]
    for p in range(1, num_pieces):  # static unroll: num_pieces is small (2-4)
        piece = jnp.dot(x, w_ref[p], preferred_element_type=jnp.float32) + b_ref[p]
        acc = jnp.maximum(acc, piece)
    o_ref[...] = acc.astype(o_ref.dtype)


def prepare_maxout_params(weight, bias, num_pieces):
    """One-time weight prep. Do NOT call per decode step.

    weight: (out*pieces, in)  PyTorch nn.Linear layout
    bias:   (out*pieces,)
    Returns (w_packed (P, K, O_pad), b_packed (P, 1, O_pad), out_features).
    """
    op, k = weight.shape
    assert op % num_pieces == 0
    o = op // num_pieces
    o_pad = _round_up(o, 128)  # lane-dense output tiles
    # view(-1, P, O) on the fc output => piece p, feature m comes from row p*O + m.
    w = weight.reshape(num_pieces, o, k).transpose(0, 2, 1)  # (P, K, O), x @ W layout
    b = bias.reshape(num_pieces, 1, o)                       # (P, 1, O)
    if o_pad != o:
        w = jnp.pad(w, ((0, 0), (0, 0), (0, o_pad - o)))
        b = jnp.pad(b, ((0, 0), (0, 0), (0, o_pad - o)))
    return (jnp.asarray(w, jnp.float32), jnp.asarray(b, jnp.float32), o)


@functools.partial(jax.jit, static_argnames=("out_features",))
def maxout_forward(x, w_packed, b_packed, out_features):
    b_dim, k = x.shape
    p, k_w, o_pad = w_packed.shape
    assert k == k_w

    # Batch tiling: pad to sublane multiple, tile at <=128 rows.
    b_pad = _round_up(b_dim, 8)
    tb = b_pad if b_pad <= 128 else 128
    b_pad = _round_up(b_pad, tb)
    if b_pad != b_dim:
        x = jnp.pad(x, ((0, b_pad - b_dim), (0, 0)))

    # Output tiling: o_pad is a multiple of 128 by construction.
    if o_pad % 512 == 0:
        to = 512
    elif o_pad % 256 == 0:
        to = 256
    else:
        to = 128

    grid = (b_pad // tb, o_pad // to)
    out = pl.pallas_call(
        maxout_kernel,
        out_shape=jax.ShapeDtypeStruct((b_pad, o_pad), jnp.float32),
        grid_spec=pltpu.PrefetchScalarGridSpec(
            num_scalar_prefetch=0,
            grid=grid,
            in_specs=[
                pl.BlockSpec((tb, k), lambda i, j: (i, 0)),        # activations
                pl.BlockSpec((p, k, to), lambda i, j: (0, 0, j)),  # per-piece weights
                pl.BlockSpec((p, 1, to), lambda i, j: (0, 0, j)),  # per-piece biases
            ],
            out_specs=pl.BlockSpec((tb, to), lambda i, j: (i, j)),
        ),
        compiler_params=pltpu.CompilerParams(
            dimension_semantics=("parallel", "parallel")),
    )(x, w_packed, b_packed)
    return out[:b_dim, :out_features]


def reference_maxout(x, weight, bias, num_pieces):
    """Pure-JAX mirror of the PyTorch MaxoutLayer.forward."""
    out = x @ weight.T + bias
    b_dim = x.shape[0]
    o = out.shape[1] // num_pieces
    out = out.reshape(b_dim, num_pieces, o)
    return out.max(axis=1)


if __name__ == "__main__":
    key = jax.random.PRNGKey(0)

    configs = [
        # (batch, in_features, out_features, num_pieces)
        (256, 256, 256, 2),  # tile-aligned: lane-dense output, batch-tiled grid
        (6, 48, 24, 3),      # odd small shapes: exercises batch/lane padding path
    ]
    for cfg_idx, (batch, in_features, out_features, num_pieces) in enumerate(configs):
        kx, kw, kb, key = jax.random.split(key, 4)
        x = 0.1 * jax.random.normal(kx, (batch, in_features), jnp.float32)
        weight = 0.1 * jax.random.normal(
            kw, (out_features * num_pieces, in_features), jnp.float32)
        bias = 0.1 * jax.random.normal(kb, (out_features * num_pieces,), jnp.float32)

        # One-time prep (outside any decode loop).
        w_packed, b_packed, o = prepare_maxout_params(weight, bias, num_pieces)

        out = maxout_forward(x, w_packed, b_packed, o)
        out = jax.block_until_ready(out)

        ref = reference_maxout(x, weight, bias, num_pieces)
        assert out.shape == (batch, out_features), out.shape
        max_err = float(jnp.max(jnp.abs(out - ref)))
        assert jnp.allclose(out, ref, atol=1e-2, rtol=1e-2), (
            f"config {cfg_idx}: max abs err {max_err}")

    print("KERNEL_OK")
</pallas_src>

<mosaic_0001>
module attributes {stable_mosaic.version = 11 : i64} {
  func.func @maxout_kernel(%arg0: i32, %arg1: i32, %arg2: memref<128x256xf32, #tpu.memory_space<vmem>>, %arg3: memref<2x256x256xf32, #tpu.memory_space<vmem>>, %arg4: memref<2x1x256xf32, #tpu.memory_space<vmem>>, %arg5: memref<128x256xf32, #tpu.memory_space<vmem>>) attributes {dimension_semantics = [#tpu.dimension_semantics<parallel>, #tpu.dimension_semantics<parallel>], iteration_bounds = array<i64: 2, 1>, scalar_prefetch = 0 : i64, scratch_operands = 0 : i64, tpu.core_type = #tpu.core_type<tc>, window_params = [{transform_indices = @transform_0, window_bounds = array<i64: 128, 256>}, {transform_indices = @transform_1, window_bounds = array<i64: 2, 256, 256>}, {transform_indices = @transform_2, window_bounds = array<i64: 2, 1, 256>}, {transform_indices = @transform_3, window_bounds = array<i64: 128, 256>}]} {
    %c0 = arith.constant 0 : index
    %c0_0 = arith.constant 0 : index
    %0 = vector.load %arg2[%c0, %c0_0] : memref<128x256xf32, #tpu.memory_space<vmem>>, vector<128x256xf32>
    %c0_1 = arith.constant 0 : index
    %c0_2 = arith.constant 0 : index
    %c0_3 = arith.constant 0 : index
    %1 = vector.load %arg3[%c0_1, %c0_2, %c0_3] : memref<2x256x256xf32, #tpu.memory_space<vmem>>, vector<1x256x256xf32>
    %2 = vector.shape_cast %1 : vector<1x256x256xf32> to vector<256x256xf32>
    %cst = arith.constant dense<0.000000e+00> : vector<128x256xf32>
    %3 = tpu.matmul %0, %2, %cst {dimension_numbers = #tpu.dot_dimension_numbers<[1], [0], [0], [1], [0, 0, 1, 1], [], []>} : vector<128x256xf32>, vector<256x256xf32>, vector<128x256xf32> -> vector<128x256xf32>
    %c0_4 = arith.constant 0 : index
    %c0_5 = arith.constant 0 : index
    %c0_6 = arith.constant 0 : index
    %4 = vector.load %arg4[%c0_4, %c0_5, %c0_6] : memref<2x1x256xf32, #tpu.memory_space<vmem>>, vector<1x1x256xf32>
    %5 = vector.shape_cast %4 : vector<1x1x256xf32> to vector<1x256xf32>
    %6 = vector.broadcast %5 : vector<1x256xf32> to vector<128x256xf32>
    %7 = arith.addf %3, %6 : vector<128x256xf32>
    %c1 = arith.constant 1 : index
    %c0_7 = arith.constant 0 : index
    %c0_8 = arith.constant 0 : index
    %8 = vector.load %arg3[%c1, %c0_7, %c0_8] : memref<2x256x256xf32, #tpu.memory_space<vmem>>, vector<1x256x256xf32>
    %9 = vector.shape_cast %8 : vector<1x256x256xf32> to vector<256x256xf32>
    %cst_9 = arith.constant dense<0.000000e+00> : vector<128x256xf32>
    %10 = tpu.matmul %0, %9, %cst_9 {dimension_numbers = #tpu.dot_dimension_numbers<[1], [0], [0], [1], [0, 0, 1, 1], [], []>} : vector<128x256xf32>, vector<256x256xf32>, vector<128x256xf32> -> vector<128x256xf32>
    %c1_10 = arith.constant 1 : index
    %c0_11 = arith.constant 0 : index
    %c0_12 = arith.constant 0 : index
    %11 = vector.load %arg4[%c1_10, %c0_11, %c0_12] : memref<2x1x256xf32, #tpu.memory_space<vmem>>, vector<1x1x256xf32>
    %12 = vector.shape_cast %11 : vector<1x1x256xf32> to vector<1x256xf32>
    %13 = vector.broadcast %12 : vector<1x256xf32> to vector<128x256xf32>
    %14 = arith.addf %10, %13 : vector<128x256xf32>
    %15 = arith.maximumf %7, %14 : vector<128x256xf32>
    %c0_13 = arith.constant 0 : index
    %c0_14 = arith.constant 0 : index
    %16 = vector.load %arg5[%c0_13, %c0_14] : memref<128x256xf32, #tpu.memory_space<vmem>>, vector<128x256xf32>
    tpu.vector_store %arg5[%c0_13, %c0_14], %15 {strides = array<i32>} : memref<128x256xf32, #tpu.memory_space<vmem>>, vector<128x256xf32>,
    return
  }
  func.func @transform_0(%arg0: i32, %arg1: i32) -> (i32, i32) {
    %c0_i32 = arith.constant 0 : i32
    %c0_i32_0 = arith.constant 0 : i32
    return %arg0, %c0_i32 : i32, i32
  }
  func.func @transform_1(%arg0: i32, %arg1: i32) -> (i32, i32, i32) {
    %c0_i32 = arith.constant 0 : i32
    %c0_i32_0 = arith.constant 0 : i32
    %c0_i32_1 = arith.constant 0 : i32
    return %c0_i32, %c0_i32_0, %arg1 : i32, i32, i32
  }
  func.func @transform_2(%arg0: i32, %arg1: i32) -> (i32, i32, i32) {
    %c0_i32 = arith.constant 0 : i32
    %c0_i32_0 = arith.constant 0 : i32
    %c0_i32_1 = arith.constant 0 : i32
    return %c0_i32, %c0_i32_0, %arg1 : i32, i32, i32
  }
  func.func @transform_3(%arg0: i32, %arg1: i32) -> (i32, i32) {
    %c0_i32 = arith.constant 0 : i32
    return %arg0, %arg1 : i32, i32
  }
}

</mosaic_0001>

<llo_original>
// kernel: maxout_forward.1
$region0: #{maxout_forward.1}
  #allocation0 [shape = 'u32[]', space=smem, size = 0x4, offset = 0x4, fixed_abs, tag = 'smem constant byte address 0x4 - core index']
  #allocation1 [shape = 'u32[144,128]{1,0:T(1,128)}', space=vmem, size = 0x12000, scoped, tag = 'internal scratch']
  %s0 = inlined_call_operand.hbm [shape: f32[256,256], index: 0, kind: input, shape index: {}]
  %s1 = inlined_call_operand.hbm [shape: f32[2,256,256], index: 1, kind: input, shape index: {}]
  %s2 = inlined_call_operand.hbm [shape: f32[2,1,256], index: 2, kind: input, shape index: {}]
  %s3 = inlined_call_operand.hbm [shape: f32[256,256], index: 3, kind: output, shape index: {}]
  %s4 = sld [smem:[#allocation0]]
  $region57: #{maxout_forward.1} parent=0
    _
  %s6 = ssub.s32 1, %s4
  %s7 = scalar_select 0, %s6, %s4
  $region1: #{maxout_forward.1} parent=0
    #allocation2 [shape = 'u8[262144]{0}', space=vmem, size = 0x40000, scoped, tag = 'input window, operand 0']
    #allocation3 [shape = 's32[2]{0}', space=sflag, size = 0x8, scoped, tag = 'scoped memory for maxout_forward.1']
    #allocation4 [shape = 's32[2]{0}', space=sflag, size = 0x8, scoped, tag = 'scoped memory for maxout_forward.1']
    #allocation5 [shape = 'u8[524288]{0}', space=vmem, size = 0x80000, scoped, tag = 'input window, operand 1, single buffered']
    #allocation6 [shape = 's32[1]{0}', space=sflag, size = 0x4, scoped, tag = 'scoped memory for maxout_forward.1']
    #allocation7 [shape = 'u8[2048]{0}', space=vmem, size = 0x800, scoped, tag = 'input window, operand 2, single buffered']
    #allocation8 [shape = 'u8[262144]{0}', space=vmem, size = 0x40000, scoped, tag = 'output window, operand 0']
    %8 = vsyncpa [#allocation3], 0
    %s9 = scalar_lea.sflag [#allocation3], 1
    %10 = vsyncpa %s9, 0
    %11 = vsyncpa [#allocation6], 0
    %12 = vsyncpa [#allocation4], 0
    %s13 = scalar_lea.sflag [#allocation4], 1
    %14 = vsyncpa %s13, 0
    loop: start=0, step=1, limit=4
    $region2: #{maxout_forward.1} parent=1 // loop_pre_header
      _
    $region3: #{maxout_forward.1} parent=1 // loop_header
      %s16 = sphi 0, %s20
      %p17 = scmp.ge.s32.totalorder %s16, 4
      %s23 = sphi 0, %s35
      %s24 = sphi 0, %s31
      %s25 = sphi 0, %s23
      %s26 = sphi 0, %s24
      %s27 = sphi 0, %s25
      %s28 = sphi 0, %s26
      %s38 = sphi 0, %s40
      %s41 = sphi 0, %s38
      %s42 = sphi 0, %s41
      %s58 = sphi 0, %s42
      %s64 = sphi 0, %s66
      %s67 = sphi 0, %s64
      %s68 = sphi 0, %s67
      %s84 = sphi 0, %s68
      %s90 = sphi 0, %s92
      %s93 = sphi 0, %s90
      %s94 = sphi 0, %s93
      %s110 = sphi 0, %s94
      %s118 = sphi 0, %s120
      %s121 = sphi 0, %s118
      %s122 = sphi 0, %s121
      %s138 = sphi 0, %s122
    $region4: #{maxout_forward.1} parent=1 // loop_header_branch
      %19 = sbr.rel (%p17) target = $region8
    $region5: #{maxout_forward.1} parent=1 // loop_body
      %s21 = ssub.s32 %s16, 1
      %s22 = ssub.s32 %s16, 2
      %s29 = sadd.s32 1, %s24
      %p30 = scmp.ge.s32.totalorder %s29, 1
      %s31 = scalar_select %p30, 0, %s29
      %s32 = sadd.s32 1, %s23
      %s33 = scalar_select %p30, %s32, %s23
      %p34 = scmp.ge.s32.totalorder %s33, 2
      %s35 = scalar_select %p34, 0, %s33
      %s36 = ssub.s32 %s23, %s35
      %p37 = scmp.eq.s32.totalorder %s36, 0
      %s39 = sadd.s32 %s38, 1
      %s40 = scalar_select %p37, %s38, %s39
      %p43 = pneg %p37
      %p44 = scmp.eq.s32.totalorder %s16, 1
      %p45 = por %p43, %p44
      %p46 = scmp.ne.s32.totalorder %s38, %s41
      %p47 = scmp.eq.s32.totalorder %s16, 0
      %p48 = por %p46, %p47
      %p49 = scmp.ne.s32.totalorder %s38, %s41
      %p50 = scmp.eq.s32.totalorder %s21, 1
      %p51 = por %p49, %p50
      %p52 = scmp.ne.s32.totalorder %s41, %s42
      %p53 = scmp.eq.s32.totalorder %s21, 0
      %p54 = por %p52, %p53
      %p55 = scmp.ne.s32.totalorder %s41, %s42
      %p56 = scmp.eq.s32.totalorder %s22, 1
      %p57 = por %p55, %p56
      %p59 = scmp.ne.s32.totalorder %s42, %s58
      %p60 = scmp.eq.s32.totalorder %s22, 0
      %p61 = por %p59, %p60
      %s62 = ssub.s32 %s24, %s31
      %p63 = scmp.eq.s32.totalorder %s62, 0
      %s65 = sadd.s32 %s64, 1
      %s66 = scalar_select %p63, %s64, %s65
      %p69 = pneg %p63
      %p70 = scmp.eq.s32.totalorder %s16, 1
      %p71 = por %p69, %p70
      %p72 = scmp.ne.s32.totalorder %s64, %s67
      %p73 = scmp.eq.s32.totalorder %s16, 0
      %p74 = por %p72, %p73
      %p75 = scmp.ne.s32.totalorder %s64, %s67
      %p76 = scmp.eq.s32.totalorder %s21, 1
      %p77 = por %p75, %p76
      %p78 = scmp.ne.s32.totalorder %s67, %s68
      %p79 = scmp.eq.s32.totalorder %s21, 0
      %p80 = por %p78, %p79
      %p81 = scmp.ne.s32.totalorder %s67, %s68
      %p82 = scmp.eq.s32.totalorder %s22, 1
      %p83 = por %p81, %p82
      %p85 = scmp.ne.s32.totalorder %s68, %s84
      %p86 = scmp.eq.s32.totalorder %s22, 0
      %p87 = por %p85, %p86
      %s88 = ssub.s32 %s24, %s31
      %p89 = scmp.eq.s32.totalorder %s88, 0
      %s91 = sadd.s32 %s90, 1
      %s92 = scalar_select %p89, %s90, %s91
      %p95 = pneg %p89
      %p96 = scmp.eq.s32.totalorder %s16, 1
      %p97 = por %p95, %p96
      %p98 = scmp.ne.s32.totalorder %s90, %s93
      %p99 = scmp.eq.s32.totalorder %s16, 0
      %p100 = por %p98, %p99
      %p101 = scmp.ne.s32.totalorder %s90, %s93
      %p102 = scmp.eq.s32.totalorder %s21, 1
      %p103 = por %p101, %p102
      %p104 = scmp.ne.s32.totalorder %s93, %s94
      %p105 = scmp.eq.s32.totalorder %s21, 0
      %p106 = por %p104, %p105
      %p107 = scmp.ne.s32.totalorder %s93, %s94
      %p108 = scmp.eq.s32.totalorder %s22, 1
      %p109 = por %p107, %p108
      %p111 = scmp.ne.s32.totalorder %s94, %s110
      %p112 = scmp.eq.s32.totalorder %s22, 0
      %p113 = por %p111, %p112
      %s114 = ssub.s32 %s23, %s35
      %s115 = ssub.s32 %s24, %s31
      %s116 = sor.u32 %s114, %s115
      %p117 = scmp.eq.s32.totalorder %s116, 0
      %s119 = sadd.s32 %s118, 1
      %s120 = scalar_select %p117, %s118, %s119
      %p123 = pneg %p117
      %p124 = scmp.eq.s32.totalorder %s16, 1
      %p125 = por %p123, %p124
      %p126 = scmp.ne.s32.totalorder %s118, %s121
      %p127 = scmp.eq.s32.totalorder %s16, 0
      %p128 = por %p126, %p127
      %p129 = scmp.ne.s32.totalorder %s118, %s121
      %p130 = scmp.eq.s32.totalorder %s21, 1
      %p131 = por %p129, %p130
      %p132 = scmp.ne.s32.totalorder %s121, %s122
      %p133 = scmp.eq.s32.totalorder %s21, 0
      %p134 = por %p132, %p133
      %p135 = scmp.ne.s32.totalorder %s121, %s122
      %p136 = scmp.eq.s32.totalorder %s22, 1
      %p137 = por %p135, %p136
      %p139 = scmp.ne.s32.totalorder %s122, %s138
      %p140 = scmp.eq.s32.totalorder %s22, 0
      %p141 = por %p139, %p140
      %p142 = scmp.le.s32.totalorder 1, %s16
      %p143 = scmp.lt.s32.totalorder %s16, 3
      %p144 = pnand %p142, %p143
      %p145 = pneg %p144
      // Predicated region
      $region9: #{maxout_forward.1} parent=5 // pred_check
        _
      $region10: #{maxout_forward.1} parent=5 // pred_check_branch
        %147 = sbr.rel (%p144) target = $region12
      $region11: #{maxout_forward.1} parent=5 // pred_region
        %s148 = ssub.s32 %s16, 1
        // Predicated region
        $region13: #{maxout_forward.1} parent=11 // pred_check
          %p149 = pneg %p80
        $region14: #{maxout_forward.1} parent=11 // pred_check_branch
          %151 = sbr.rel (%p149) target = $region16
        $region15: #{maxout_forward.1} parent=11 // pred_region
          %s152 = smul.u32 2, %s26
          %s154 = ssub.s32 16384, 16384
          %155 = vsyncadd [#allocation6], %s154
          %s156 = smul.addr %s152, 128
          %s157 = scalar_lea.hbm %s1, %s156
          %s158 = sshll.u32 [#allocation5], 4
          %s159 = int_to_ptr.vmem [resolvable:$true] %s158
          %164 = dma.hbm_to_vmem [thread:$0]  %s157, 16384, %s159, [#allocation6], 256, 256, 16
        $region16: #{maxout_forward.1} parent=11 // pred_fallthru
          _
        // Predicated region
        $region17: #{maxout_forward.1} parent=11 // pred_check
          %p165 = pneg %p106
        $region18: #{maxout_forward.1} parent=11 // pred_check_branch
          %167 = sbr.rel (%p165) target = $region20
        $region19: #{maxout_forward.1} parent=11 // pred_region
          %s168 = smul.u32 2, %s26
          %s170 = ssub.s32 64, 64
          %171 = vsyncadd [#allocation6], %s170
          %s172 = smul.addr %s168, 16
          %s173 = scalar_lea.hbm %s2, %s172
          %s174 = sshll.u32 [#allocation7], 4
          %s175 = int_to_ptr.vmem [resolvable:$true] %s174
          %180 = dma.hbm_to_vmem [thread:$0]  %s173, 64, %s175, [#allocation6], 32, 32, 2
        $region20: #{maxout_forward.1} parent=11 // pred_fallthru
          _
      $region12: #{maxout_forward.1} parent=5 // pred_fallthru
        _
      %p181 = scmp.lt.s32.totalorder %s16, 2
      // Predicated region
      $region21: #{maxout_forward.1} parent=5 // pred_check
        %p182 = pneg %p181
      $region22: #{maxout_forward.1} parent=5 // pred_check_branch
        %184 = sbr.rel (%p182) target = $region24
      $region23: #{maxout_forward.1} parent=5 // pred_region
        // Predicated region
        $region25: #{maxout_forward.1} parent=23 // pred_check
          %p185 = pneg %p48
        $region26: #{maxout_forward.1} parent=23 // pred_check_branch
          %187 = sbr.rel (%p185) target = $region28
        $region27: #{maxout_forward.1} parent=23 // pred_region
          %s188 = sand.u32 %s38, 1
          %s189 = scalar_lea.sflag [#allocation3], %s188
          %s190 = sand.u32 %s38, 1
          %s191 = smul.addr %s190, 256
          %s192 = scalar_lea.vmem [#allocation2], %s191
          %s193 = smul.u32 16, %s23
          %s195 = ssub.s32 4096, 4096
          %196 = vsyncadd %s189, %s195
          %s197 = smul.addr %s193, 2
          %s198 = smul.addr %s197, 128
          %s199 = scalar_lea.hbm %s0, %s198
          %s200 = sshll.u32 %s192, 4
          %s201 = int_to_ptr.vmem [resolvable:$true] %s200
          %206 = dma.hbm_to_vmem [thread:$0]  %s199, 4096, %s201, %s189, 256, 256, 16
        $region28: #{maxout_forward.1} parent=23 // pred_fallthru
          _
      $region24: #{maxout_forward.1} parent=5 // pred_fallthru
        _
      %p207 = scmp.le.s32.totalorder 1, %s16
      %p208 = scmp.lt.s32.totalorder %s16, 3
      %p209 = pnand %p207, %p208
      %p210 = pneg %p209
      // Predicated region
      $region29: #{maxout_forward.1} parent=5 // pred_check
        _
      $region30: #{maxout_forward.1} parent=5 // pred_check_branch
        %212 = sbr.rel (%p209) target = $region32
      $region31: #{maxout_forward.1} parent=5 // pred_region
        %s213 = ssub.s32 %s16, 1
        %s214 = sand.u32 %s41, 1
        %s215 = scalar_lea.sflag [#allocation3], %s214
        %s216 = sand.u32 %s41, 1
        %s217 = smul.addr %s216, 256
        %s218 = scalar_lea.vmem [#allocation2], %s217
        // Predicated region
        $region33: #{maxout_forward.1} parent=31 // pred_check
          %p219 = pneg %p54
        $region34: #{maxout_forward.1} parent=31 // pred_check_branch
          %221 = sbr.rel (%p219) target = $region36
        $region35: #{maxout_forward.1} parent=31 // pred_region
          %222 = dma.done %s215, 4096
        $region36: #{maxout_forward.1} parent=31 // pred_fallthru
          _
        // Predicated region
        $region37: #{maxout_forward.1} parent=31 // pred_check
          %p223 = pneg %p80
        $region38: #{maxout_forward.1} parent=31 // pred_check_branch
          %225 = sbr.rel (%p223) target = $region40
        $region39: #{maxout_forward.1} parent=31 // pred_region
          %226 = dma.done [#allocation6], 16384
        $region40: #{maxout_forward.1} parent=31 // pred_fallthru
          _
        // Predicated region
        $region41: #{maxout_forward.1} parent=31 // pred_check
          %p227 = pneg %p106
        $region42: #{maxout_forward.1} parent=31 // pred_check_branch
          %229 = sbr.rel (%p227) target = $region44
        $region43: #{maxout_forward.1} parent=31 // pred_region
          %230 = dma.done [#allocation6], 64
        $region44: #{maxout_forward.1} parent=31 // pred_fallthru
          _
        %s231 = sand.u32 %s41, 1
        %s232 = scalar_lea.sflag [#allocation3], %s231
        %s233 = sand.u32 %s41, 1
        %s234 = smul.addr %s233, 256
        %s235 = scalar_lea.vmem [#allocation2], %s234
        %p236 = pneg %p54
        %p237 = pneg %p51
        %p238 = pneg %p80
        %p239 = pneg %p77
        %p240 = pneg %p106
        %p241 = pneg %p103
        %p242 = pneg %p134
        %p243 = pneg %p131
        %s244 = sand.u32 %s121, 1
        %s245 = scalar_lea.sflag [#allocation4], %s244
        %s246 = sand.u32 %s121, 1
        %s247 = smul.addr %s246, 256
        %s248 = scalar_lea.vmem [#allocation8], %s247
        %s249 = smul.u32 16, %s25
        %s250 = smul.u32 2, %s26
        %s251 = smul.u32 2, %s26
        %s252 = smul.u32 16, %s25
        %s253 = smul.u32 2, %s26
        %v254 = vld [vmem:[%s218] sm:$0xff]
        %v255 = vld [vmem:[%s218 + $0x8] sm:$0xff]
        %v256 = vld [vmem:[%s218 + $0x10] sm:$0xff]
        %v257 = vld [vmem:[%s218 + $0x18] sm:$0xff]
        %v258 = vld [vmem:[%s218 + $0x20] sm:$0xff]
        %v259 = vld [vmem:[%s218 + $0x28] sm:$0xff]
        %v260 = vld [vmem:[%s218 + $0x30] sm:$0xff]
        %v261 = vld [vmem:[%s218 + $0x38] sm:$0xff]
        %v262 = vld [vmem:[%s218 + $0x40] sm:$0xff]
        %v263 = vld [vmem:[%s218 + $0x48] sm:$0xff]
        %v264 = vld [vmem:[%s218 + $0x50] sm:$0xff]
        %v265 = vld [vmem:[%s218 + $0x58] sm:$0xff]
        %v266 = vld [vmem:[%s218 + $0x60] sm:$0xff]
        %v267 = vld [vmem:[%s218 + $0x68] sm:$0xff]
        %v268 = vld [vmem:[%s218 + $0x70] sm:$0xff]
        %v269 = vld [vmem:[%s218 + $0x78] sm:$0xff]
        %v270 = vld [vmem:[%s218 + $0x80] sm:$0xff]
        %v271 = vld [vmem:[%s218 + $0x88] sm:$0xff]
        %v272 = vld [vmem:[%s218 + $0x90] sm:$0xff]
        %v273 = vld [vmem:[%s218 + $0x98] sm:$0xff]
        %v274 = vld [vmem:[%s218 + $0xa0] sm:$0xff]
        %v275 = vld [vmem:[%s218 + $0xa8] sm:$0xff]
        %v276 = vld [vmem:[%s218 + $0xb0] sm:$0xff]
        %v277 = vld [vmem:[%s218 + $0xb8] sm:$0xff]
        %v278 = vld [vmem:[%s218 + $0xc0] sm:$0xff]
        %v279 = vld [vmem:[%s218 + $0xc8] sm:$0xff]
        %v280 = vld [vmem:[%s218 + $0xd0] sm:$0xff]
        %v281 = vld [vmem:[%s218 + $0xd8] sm:$0xff]
        %v282 = vld [vmem:[%s218 + $0xe0] sm:$0xff]
        %v283 = vld [vmem:[%s218 + $0xe8] sm:$0xff]
        %v284 = vld [vmem:[%s218 + $0xf0] sm:$0xff]
        %v285 = vld [vmem:[%s218 + $0xf8] sm:$0xff]
        %v286 = vld [vmem:[#allocation5] sm:$0xff]
        %v287 = vld [vmem:[#allocation5 + $0x8] sm:$0xff]
        %v288 = vld [vmem:[#allocation5 + $0x10] sm:$0xff]
        %v289 = vld [vmem:[#allocation5 + $0x18] sm:$0xff]
        %v290 = vld [vmem:[#allocation5 + $0x20] sm:$0xff]
        %v291 = vld [vmem:[#allocation5 + $0x28] sm:$0xff]
        %v292 = vld [vmem:[#allocation5 + $0x30] sm:$0xff]
        %v293 = vld [vmem:[#allocation5 + $0x38] sm:$0xff]
        %v294 = vld [vmem:[#allocation5 + $0x40] sm:$0xff]
        %v295 = vld [vmem:[#allocation5 + $0x48] sm:$0xff]
        %v296 = vld [vmem:[#allocation5 + $0x50] sm:$0xff]
        %v297 = vld [vmem:[#allocation5 + $0x58] sm:$0xff]
        %v298 = vld [vmem:[#allocation5 + $0x60] sm:$0xff]
        %v299 = vld [vmem:[#allocation5 + $0x68] sm:$0xff]
        %v300 = vld [vmem:[#allocation5 + $0x70] sm:$0xff]
        %v301 = vld [vmem:[#allocation5 + $0x78] sm:$0xff]
        %v302 = vld [vmem:[#allocation5 + $0x80] sm:$0xff]
        %v303 = vld [vmem:[#allocation5 + $0x88] sm:$0xff]
        %v304 = vld [vmem:[#allocation5 + $0x90] sm:$0xff]
        %v305 = vld [vmem:[#allocation5 + $0x98] sm:$0xff]
        %v306 = vld [vmem:[#allocation5 + $0xa0] sm:$0xff]
        %v307 = vld [vmem:[#allocation5 + $0xa8] sm:$0xff]
        %v308 = vld [vmem:[#allocation5 + $0xb0] sm:$0xff]
        %v309 = vld [vmem:[#allocation5 + $0xb8] sm:$0xff]
        %v310 = vld [vmem:[#allocation5 + $0xc0] sm:$0xff]
        %v311 = vld [vmem:[#allocation5 + $0xc8] sm:$0xff]
        %v312 = vld [vmem:[#allocation5 + $0xd0] sm:$0xff]
        %v313 = vld [vmem:[#allocation5 + $0xd8] sm:$0xff]
        %v314 = vld [vmem:[#allocation5 + $0xe0] sm:$0xff]
        %v315 = vld [vmem:[#allocation5 + $0xe8] sm:$0xff]
        %v316 = vld [vmem:[#allocation5 + $0xf0] sm:$0xff]
        %v317 = vld [vmem:[#allocation5 + $0xf8] sm:$0xff]
        %v318 = vld [vmem:[#allocation5 + $0x100] sm:$0xff]
        %v319 = vld [vmem:[#allocation5 + $0x108] sm:$0xff]
        %v320 = vld [vmem:[#allocation5 + $0x110] sm:$0xff]
        %v321 = vld [vmem:[#allocation5 + $0x118] sm:$0xff]
        %v322 = vld [vmem:[#allocation5 + $0x120] sm:$0xff]
        %v323 = vld [vmem:[#allocation5 + $0x128] sm:$0xff]
        %v324 = vld [vmem:[#allocation5 + $0x130] sm:$0xff]
        %v325 = vld [vmem:[#allocation5 + $0x138] sm:$0xff]
        %v326 = vld [vmem:[#allocation5 + $0x140] sm:$0xff]
        %v327 = vld [vmem:[#allocation5 + $0x148] sm:$0xff]
        %v328 = vld [vmem:[#allocation5 + $0x150] sm:$0xff]
        %v329 = vld [vmem:[#allocation5 + $0x158] sm:$0xff]
        %v330 = vld [vmem:[#allocation5 + $0x160] sm:$0xff]
        %v331 = vld [vmem:[#allocation5 + $0x168] sm:$0xff]
        %v332 = vld [vmem:[#allocation5 + $0x170] sm:$0xff]
        %v333 = vld [vmem:[#allocation5 + $0x178] sm:$0xff]
        %v334 = vld [vmem:[#allocation5 + $0x180] sm:$0xff]
        %v335 = vld [vmem:[#allocation5 + $0x188] sm:$0xff]
        %v336 = vld [vmem:[#allocation5 + $0x190] sm:$0xff]
        %v337 = vld [vmem:[#allocation5 + $0x198] sm:$0xff]
        %v338 = vld [vmem:[#allocation5 + $0x1a0] sm:$0xff]
        %v339 = vld [vmem:[#allocation5 + $0x1a8] sm:$0xff]
        %v340 = vld [vmem:[#allocation5 + $0x1b0] sm:$0xff]
        %v341 = vld [vmem:[#allocation5 + $0x1b8] sm:$0xff]
        %v342 = vld [vmem:[#allocation5 + $0x1c0] sm:$0xff]
        %v343 = vld [vmem:[#allocation5 + $0x1c8] sm:$0xff]
        %v344 = vld [vmem:[#allocation5 + $0x1d0] sm:$0xff]
        %v345 = vld [vmem:[#allocation5 + $0x1d8] sm:$0xff]
        %v346 = vld [vmem:[#allocation5 + $0x1e0] sm:$0xff]
        %v347 = vld [vmem:[#allocation5 + $0x1e8] sm:$0xff]
        %v348 = vld [vmem:[#allocation5 + $0x1f0] sm:$0xff]
        %v349 = vld [vmem:[#allocation5 + $0x1f8] sm:$0xff]
        %v350 = vld [vmem:[#allocation7] sm:$0x3]
        %v352 = vlaneseq
        %v353 = vshrl.u32 %v352, 7
        %v354 = vsub.s32 0, %v353
        %v355 = vrot.slane %v350, %v354
        %v356 = vlaneseq
        %v357 = vshrl.u32 %v356, 7
        %v358 = vsub.s32 1, %v357
        %v359 = vrot.slane %v350, %v358
        %362 = vmatprep.subr.mxu0 %v317
        %363 = vmatpush1.msra.mxu0 %v316
        %364 = vmatprep.subr.mxu0 %v315
        %365 = vmatpush1.msra.mxu0 %v314
        %366 = vmatprep.subr.mxu0 %v313
        %367 = vmatpush1.msra.mxu0 %v312
        %368 = vmatprep.subr.mxu0 %v311
        %369 = vmatpush1.msra.mxu0 %v310
        %370 = vmatprep.subr.mxu0 %v309
        %371 = vmatpush1.msra.mxu0 %v308
        %372 = vmatprep.subr.mxu0 %v307
        %373 = vmatpush1.msra.mxu0 %v306
        %374 = vmatprep.subr.mxu0 %v305
        %375 = vmatpush1.msra.mxu0 %v304
        %376 = vmatprep.subr.mxu0 %v303
        %377 = vmatpush1.msra.mxu0 %v302
        %378 = vmatprep.subr.mxu0 %v301
        %379 = vmatpush1.msra.mxu0 %v300
        %380 = vmatprep.subr.mxu0 %v299
        %381 = vmatpush1.msra.mxu0 %v298
        %382 = vmatprep.subr.mxu0 %v297
        %383 = vmatpush1.msra.mxu0 %v296
        %384 = vmatprep.subr.mxu0 %v295
        %385 = vmatpush1.msra.mxu0 %v294
        %386 = vmatprep.subr.mxu0 %v293
        %387 = vmatpush1.msra.mxu0 %v292
        %388 = vmatprep.subr.mxu0 %v291
        %389 = vmatpush1.msra.mxu0 %v290
        %390 = vmatprep.subr.mxu0 %v289
        %391 = vmatpush1.msra.mxu0 %v288
        %392 = vmatprep.subr.mxu0 %v287
        %393 = vmatpush1.msra.mxu0 %v286
        %394 = vmatprep.subr.mxu0 %v349
        %395 = vmatpush2.msra.mxu0 %v348
        %396 = vmatprep.subr.mxu0 %v347
        %397 = vmatpush2.msra.mxu0 %v346
        %398 = vmatprep.subr.mxu0 %v345
        %399 = vmatpush2.msra.mxu0 %v344
        %400 = vmatprep.subr.mxu0 %v343
        %401 = vmatpush2.msra.mxu0 %v342
        %402 = vmatprep.subr.mxu0 %v341
        %403 = vmatpush2.msra.mxu0 %v340
        %404 = vmatprep.subr.mxu0 %v339
        %405 = vmatpush2.msra.mxu0 %v338
        %406 = vmatprep.subr.mxu0 %v337
        %407 = vmatpush2.msra.mxu0 %v336
        %408 = vmatprep.subr.mxu0 %v335
        %409 = vmatpush2.msra.mxu0 %v334
        %410 = vmatprep.subr.mxu0 %v333
        %411 = vmatpush2.msra.mxu0 %v332
        %412 = vmatprep.subr.mxu0 %v331
        %413 = vmatpush2.msra.mxu0 %v330
        %414 = vmatprep.subr.mxu0 %v329
        %415 = vmatpush2.msra.mxu0 %v328
        %416 = vmatprep.subr.mxu0 %v327
        %417 = vmatpush2.msra.mxu0 %v326
        %418 = vmatprep.subr.mxu0 %v325
        %419 = vmatpush2.msra.mxu0 %v324
        %420 = vmatprep.subr.mxu0 %v323
        %421 = vmatpush2.msra.mxu0 %v322
        %422 = vmatprep.subr.mxu0 %v321
        %423 = vmatpush2.msra.mxu0 %v320
        %424 = vmatprep.subr.mxu0 %v319
        %425 = vmatpush2.msra.mxu0 %v318
        %426 = vmatprep.mubr.f32.mxu0 %v255
        %427 = vmatmul.mubr.f32.gmra.mxu0 %v254
        %v428 = vpop.f32.mrf.mxu0
        %v429 = vadd.f32 %v355, %v428
        %v430 = vpop.f32.mrf.mxu0
        %v431 = vadd.f32 %v359, %v430
        %432 = vmatprep.mubr.f32.mxu0 %v257
        %433 = vmatmul.mubr.f32.gmra.mxu0 %v256
        %v434 = vpop.f32.mrf.mxu0
        %v435 = vadd.f32 %v355, %v434
        %v436 = vpop.f32.mrf.mxu0
        %v437 = vadd.f32 %v359, %v436
        %438 = vmatprep.mubr.f32.mxu0 %v259
        %439 = vmatmul.mubr.f32.gmra.mxu0 %v258
        %v440 = vpop.f32.mrf.mxu0
        %v441 = vadd.f32 %v355, %v440
        %v442 = vpop.f32.mrf.mxu0
        %v443 = vadd.f32 %v359, %v442
        %444 = vmatprep.mubr.f32.mxu0 %v261
        %445 = vmatmul.mubr.f32.gmra.mxu0 %v260
        %v446 = vpop.f32.mrf.mxu0
        %v447 = vadd.f32 %v355, %v446
        %v448 = vpop.f32.mrf.mxu0
        %v449 = vadd.f32 %v359, %v448
        %450 = vmatprep.mubr.f32.mxu0 %v263
        %451 = vmatmul.mubr.f32.gmra.mxu0 %v262
        %v452 = vpop.f32.mrf.mxu0
        %v453 = vadd.f32 %v355, %v452
        %v454 = vpop.f32.mrf.mxu0
        %v455 = vadd.f32 %v359, %v454
        %456 = vmatprep.mubr.f32.mxu0 %v265
        %457 = vmatmul.mubr.f32.gmra.mxu0 %v264
        %v458 = vpop.f32.mrf.mxu0
        %v459 = vadd.f32 %v355, %v458
        %v460 = vpop.f32.mrf.mxu0
        %v461 = vadd.f32 %v359, %v460
        %462 = vmatprep.mubr.f32.mxu0 %v267
        %463 = vmatmul.mubr.f32.gmra.mxu0 %v266
        %v464 = vpop.f32.mrf.mxu0
        %v465 = vadd.f32 %v355, %v464
        %v466 = vpop.f32.mrf.mxu0
        %v467 = vadd.f32 %v359, %v466
        %468 = vmatprep.mubr.f32.mxu0 %v269
        %469 = vmatmul.mubr.f32.gmra.mxu0 %v268
        %v470 = vpop.f32.mrf.mxu0
        %v471 = vadd.f32 %v355, %v470
        %v472 = vpop.f32.mrf.mxu0
        %v473 = vadd.f32 %v359, %v472
        %474 = vmatprep.mubr.f32.mxu0 %v271
        %475 = vmatmul.mubr.f32.gmra.mxu0 %v270
        %v476 = vpop.f32.mrf.mxu0
        %v477 = vadd.f32 %v355, %v476
        %v478 = vpop.f32.mrf.mxu0
        %v479 = vadd.f32 %v359, %v478
        %480 = vmatprep.mubr.f32.mxu0 %v273
        %481 = vmatmul.mubr.f32.gmra.mxu0 %v272
        %v482 = vpop.f32.mrf.mxu0
        %v483 = vadd.f32 %v355, %v482
        %v484 = vpop.f32.mrf.mxu0
        %v485 = vadd.f32 %v359, %v484
        %486 = vmatprep.mubr.f32.mxu0 %v275
        %487 = vmatmul.mubr.f32.gmra.mxu0 %v274
        %v488 = vpop.f32.mrf.mxu0
        %v489 = vadd.f32 %v355, %v488
        %v490 = vpop.f32.mrf.mxu0
        %v491 = vadd.f32 %v359, %v490
        %492 = vmatprep.mubr.f32.mxu0 %v277
        %493 = vmatmul.mubr.f32.gmra.mxu0 %v276
        %v494 = vpop.f32.mrf.mxu0
        %v495 = vadd.f32 %v355, %v494
        %v496 = vpop.f32.mrf.mxu0
        %v497 = vadd.f32 %v359, %v496
        %498 = vmatprep.mubr.f32.mxu0 %v279
        %499 = vmatmul.mubr.f32.gmra.mxu0 %v278
        %v500 = vpop.f32.mrf.mxu0
        %v501 = vadd.f32 %v355, %v500
        %v502 = vpop.f32.mrf.mxu0
        %v503 = vadd.f32 %v359, %v502
        %504 = vmatprep.mubr.f32.mxu0 %v281
        %505 = vmatmul.mubr.f32.gmra.mxu0 %v280
        %v506 = vpop.f32.mrf.mxu0
        %v507 = vadd.f32 %v355, %v506
        %v508 = vpop.f32.mrf.mxu0
        %v509 = vadd.f32 %v359, %v508
        %510 = vmatprep.mubr.f32.mxu0 %v283
        %511 = vmatmul.mubr.f32.gmra.mxu0 %v282
        %v512 = vpop.f32.mrf.mxu0
        %v513 = vadd.f32 %v355, %v512
        %v514 = vpop.f32.mrf.mxu0
        %v515 = vadd.f32 %v359, %v514
        %516 = vmatprep.mubr.f32.mxu0 %v285
        %517 = vmatmul.mubr.f32.gmra.mxu0 %v284
        %v518 = vpop.f32.mrf.mxu0
        %v519 = vadd.f32 %v355, %v518
        %v520 = vpop.f32.mrf.mxu0
        %v521 = vadd.f32 %v359, %v520
        %522 = vdwg.mxu0
        %s523 = scalar_lea.vmem [#allocation5], 512
        %v524 = vld [vmem:[%s523] sm:$0xff]
        %v525 = vld [vmem:[%s523 + $0x8] sm:$0xff]
        %v526 = vld [vmem:[%s523 + $0x10] sm:$0xff]
        %v527 = vld [vmem:[%s523 + $0x18] sm:$0xff]
        %v528 = vld [vmem:[%s523 + $0x20] sm:$0xff]
        %v529 = vld [vmem:[%s523 + $0x28] sm:$0xff]
        %v530 = vld [vmem:[%s523 + $0x30] sm:$0xff]
        %v531 = vld [vmem:[%s523 + $0x38] sm:$0xff]
        %v532 = vld [vmem:[%s523 + $0x40] sm:$0xff]
        %v533 = vld [vmem:[%s523 + $0x48] sm:$0xff]
        %v534 = vld [vmem:[%s523 + $0x50] sm:$0xff]
        %v535 = vld [vmem:[%s523 + $0x58] sm:$0xff]
        %v536 = vld [vmem:[%s523 + $0x60] sm:$0xff]
        %v537 = vld [vmem:[%s523 + $0x68] sm:$0xff]
        %v538 = vld [vmem:[%s523 + $0x70] sm:$0xff]
        %v539 = vld [vmem:[%s523 + $0x78] sm:$0xff]
        %v540 = vld [vmem:[%s523 + $0x80] sm:$0xff]
        %v541 = vld [vmem:[%s523 + $0x88] sm:$0xff]
        %v542 = vld [vmem:[%s523 + $0x90] sm:$0xff]
        %v543 = vld [vmem:[%s523 + $0x98] sm:$0xff]
        %v544 = vld [vmem:[%s523 + $0xa0] sm:$0xff]
        %v545 = vld [vmem:[%s523 + $0xa8] sm:$0xff]
        %v546 = vld [vmem:[%s523 + $0xb0] sm:$0xff]
        %v547 = vld [vmem:[%s523 + $0xb8] sm:$0xff]
        %v548 = vld [vmem:[%s523 + $0xc0] sm:$0xff]
        %v549 = vld [vmem:[%s523 + $0xc8] sm:$0xff]
        %v550 = vld [vmem:[%s523 + $0xd0] sm:$0xff]
        %v551 = vld [vmem:[%s523 + $0xd8] sm:$0xff]
        %v552 = vld [vmem:[%s523 + $0xe0] sm:$0xff]
        %v553 = vld [vmem:[%s523 + $0xe8] sm:$0xff]
        %v554 = vld [vmem:[%s523 + $0xf0] sm:$0xff]
        %v555 = vld [vmem:[%s523 + $0xf8] sm:$0xff]
        %v556 = vld [vmem:[%s523 + $0x100] sm:$0xff]
        %v557 = vld [vmem:[%s523 + $0x108] sm:$0xff]
        %v558 = vld [vmem:[%s523 + $0x110] sm:$0xff]
        %v559 = vld [vmem:[%s523 + $0x118] sm:$0xff]
        %v560 = vld [vmem:[%s523 + $0x120] sm:$0xff]
        %v561 = vld [vmem:[%s523 + $0x128] sm:$0xff]
        %v562 = vld [vmem:[%s523 + $0x130] sm:$0xff]
        %v563 = vld [vmem:[%s523 + $0x138] sm:$0xff]
        %v564 = vld [vmem:[%s523 + $0x140] sm:$0xff]
        %v565 = vld [vmem:[%s523 + $0x148] sm:$0xff]
        %v566 = vld [vmem:[%s523 + $0x150] sm:$0xff]
        %v567 = vld [vmem:[%s523 + $0x158] sm:$0xff]
        %v568 = vld [vmem:[%s523 + $0x160] sm:$0xff]
        %v569 = vld [vmem:[%s523 + $0x168] sm:$0xff]
        %v570 = vld [vmem:[%s523 + $0x170] sm:$0xff]
        %v571 = vld [vmem:[%s523 + $0x178] sm:$0xff]
        %v572 = vld [vmem:[%s523 + $0x180] sm:$0xff]
        %v573 = vld [vmem:[%s523 + $0x188] sm:$0xff]
        %v574 = vld [vmem:[%s523 + $0x190] sm:$0xff]
        %v575 = vld [vmem:[%s523 + $0x198] sm:$0xff]
        %v576 = vld [vmem:[%s523 + $0x1a0] sm:$0xff]
        %v577 = vld [vmem:[%s523 + $0x1a8] sm:$0xff]
        %v578 = vld [vmem:[%s523 + $0x1b0] sm:$0xff]
        %v579 = vld [vmem:[%s523 + $0x1b8] sm:$0xff]
        %v580 = vld [vmem:[%s523 + $0x1c0] sm:$0xff]
        %v581 = vld [vmem:[%s523 + $0x1c8] sm:$0xff]
        %v582 = vld [vmem:[%s523 + $0x1d0] sm:$0xff]
        %v583 = vld [vmem:[%s523 + $0x1d8] sm:$0xff]
        %v584 = vld [vmem:[%s523 + $0x1e0] sm:$0xff]
        %v585 = vld [vmem:[%s523 + $0x1e8] sm:$0xff]
        %v586 = vld [vmem:[%s523 + $0x1f0] sm:$0xff]
        %v587 = vld [vmem:[%s523 + $0x1f8] sm:$0xff]
        %s588 = scalar_lea.vmem [#allocation7], 2
        %v589 = vld [vmem:[%s588] sm:$0x3]
        %v591 = vlaneseq
        %v592 = vshrl.u32 %v591, 7
        %v593 = vsub.s32 0, %v592
        %v594 = vrot.slane %v589, %v593
        %v595 = vlaneseq
        %v596 = vshrl.u32 %v595, 7
        %v597 = vsub.s32 1, %v596
        %v598 = vrot.slane %v589, %v597
        %601 = vmatprep.subr.mxu0 %v555
        %602 = vmatpush1.msra.mxu0 %v554
        %603 = vmatprep.subr.mxu0 %v553
        %604 = vmatpush1.msra.mxu0 %v552
        %605 = vmatprep.subr.mxu0 %v551
        %606 = vmatpush1.msra.mxu0 %v550
        %607 = vmatprep.subr.mxu0 %v549
        %608 = vmatpush1.msra.mxu0 %v548
        %609 = vmatprep.subr.mxu0 %v547
        %610 = vmatpush1.msra.mxu0 %v546
        %611 = vmatprep.subr.mxu0 %v545
        %612 = vmatpush1.msra.mxu0 %v544
        %613 = vmatprep.subr.mxu0 %v543
        %614 = vmatpush1.msra.mxu0 %v542
        %615 = vmatprep.subr.mxu0 %v541
        %616 = vmatpush1.msra.mxu0 %v540
        %617 = vmatprep.subr.mxu0 %v539
        %618 = vmatpush1.msra.mxu0 %v538
        %619 = vmatprep.subr.mxu0 %v537
        %620 = vmatpush1.msra.mxu0 %v536
        %621 = vmatprep.subr.mxu0 %v535
        %622 = vmatpush1.msra.mxu0 %v534
        %623 = vmatprep.subr.mxu0 %v533
        %624 = vmatpush1.msra.mxu0 %v532
        %625 = vmatprep.subr.mxu0 %v531
        %626 = vmatpush1.msra.mxu0 %v530
        %627 = vmatprep.subr.mxu0 %v529
        %628 = vmatpush1.msra.mxu0 %v528
        %629 = vmatprep.subr.mxu0 %v527
        %630 = vmatpush1.msra.mxu0 %v526
        %631 = vmatprep.subr.mxu0 %v525
        %632 = vmatpush1.msra.mxu0 %v524
        %633 = vmatprep.subr.mxu0 %v587
        %634 = vmatpush2.msra.mxu0 %v586
        %635 = vmatprep.subr.mxu0 %v585
        %636 = vmatpush2.msra.mxu0 %v584
        %637 = vmatprep.subr.mxu0 %v583
        %638 = vmatpush2.msra.mxu0 %v582
        %639 = vmatprep.subr.mxu0 %v581
        %640 = vmatpush2.msra.mxu0 %v580
        %641 = vmatprep.subr.mxu0 %v579
        %642 = vmatpush2.msra.mxu0 %v578
        %643 = vmatprep.subr.mxu0 %v577
        %644 = vmatpush2.msra.mxu0 %v576
        %645 = vmatprep.subr.mxu0 %v575
        %646 = vmatpush2.msra.mxu0 %v574
        %647 = vmatprep.subr.mxu0 %v573
        %648 = vmatpush2.msra.mxu0 %v572
        %649 = vmatprep.subr.mxu0 %v571
        %650 = vmatpush2.msra.mxu0 %v570
        %651 = vmatprep.subr.mxu0 %v569
        %652 = vmatpush2.msra.mxu0 %v568
        %653 = vmatprep.subr.mxu0 %v567
        %654 = vmatpush2.msra.mxu0 %v566
        %655 = vmatprep.subr.mxu0 %v565
        %656 = vmatpush2.msra.mxu0 %v564
        %657 = vmatprep.subr.mxu0 %v563
        %658 = vmatpush2.msra.mxu0 %v562
        %659 = vmatprep.subr.mxu0 %v561
        %660 = vmatpush2.msra.mxu0 %v560
        %661 = vmatprep.subr.mxu0 %v559
        %662 = vmatpush2.msra.mxu0 %v558
        %663 = vmatprep.subr.mxu0 %v557
        %664 = vmatpush2.msra.mxu0 %v556
        %665 = vmatprep.mubr.f32.mxu0 %v255
        %666 = vmatmul.mubr.f32.gmra.mxu0 %v254
        %v667 = vpop.f32.mrf.mxu0
        %v668 = vadd.f32 %v594, %v667
        %v669 = vpop.f32.mrf.mxu0
        %v670 = vadd.f32 %v598, %v669
        %671 = vmatprep.mubr.f32.mxu0 %v257
        %672 = vmatmul.mubr.f32.gmra.mxu0 %v256
        %v673 = vpop.f32.mrf.mxu0
        %v674 = vadd.f32 %v594, %v673
        %v675 = vpop.f32.mrf.mxu0
        %v676 = vadd.f32 %v598, %v675
        %677 = vmatprep.mubr.f32.mxu0 %v259
        %678 = vmatmul.mubr.f32.gmra.mxu0 %v258
        %v679 = vpop.f32.mrf.mxu0
        %v680 = vadd.f32 %v594, %v679
        %v681 = vpop.f32.mrf.mxu0
        %v682 = vadd.f32 %v598, %v681
        %683 = vmatprep.mubr.f32.mxu0 %v261
        %684 = vmatmul.mubr.f32.gmra.mxu0 %v260
        %v685 = vpop.f32.mrf.mxu0
        %v686 = vadd.f32 %v594, %v685
        %v687 = vpop.f32.mrf.mxu0
        %v688 = vadd.f32 %v598, %v687
        %689 = vmatprep.mubr.f32.mxu0 %v263
        %690 = vmatmul.mubr.f32.gmra.mxu0 %v262
        %v691 = vpop.f32.mrf.mxu0
        %v692 = vadd.f32 %v594, %v691
        %v693 = vpop.f32.mrf.mxu0
        %v694 = vadd.f32 %v598, %v693
        %695 = vmatprep.mubr.f32.mxu0 %v265
        %696 = vmatmul.mubr.f32.gmra.mxu0 %v264
        %v697 = vpop.f32.mrf.mxu0
        %v698 = vadd.f32 %v594, %v697
        %v699 = vpop.f32.mrf.mxu0
        %v700 = vadd.f32 %v598, %v699
        %701 = vmatprep.mubr.f32.mxu0 %v267
        %702 = vmatmul.mubr.f32.gmra.mxu0 %v266
        %v703 = vpop.f32.mrf.mxu0
        %v704 = vadd.f32 %v594, %v703
        %v705 = vpop.f32.mrf.mxu0
        %v706 = vadd.f32 %v598, %v705
        %707 = vmatprep.mubr.f32.mxu0 %v269
        %708 = vmatmul.mubr.f32.gmra.mxu0 %v268
        %v709 = vpop.f32.mrf.mxu0
        %v710 = vadd.f32 %v594, %v709
        %v711 = vpop.f32.mrf.mxu0
        %v712 = vadd.f32 %v598, %v711
        %713 = vmatprep.mubr.f32.mxu0 %v271
        %714 = vmatmul.mubr.f32.gmra.mxu0 %v270
        %v715 = vpop.f32.mrf.mxu0
        %v716 = vadd.f32 %v594, %v715
        %v717 = vpop.f32.mrf.mxu0
        %v718 = vadd.f32 %v598, %v717
        %719 = vmatprep.mubr.f32.mxu0 %v273
        %720 = vmatmul.mubr.f32.gmra.mxu0 %v272
        %v721 = vpop.f32.mrf.mxu0
        %v722 = vadd.f32 %v594, %v721
        %v723 = vpop.f32.mrf.mxu0
        %v724 = vadd.f32 %v598, %v723
        %725 = vmatprep.mubr.f32.mxu0 %v275
        %726 = vmatmul.mubr.f32.gmra.mxu0 %v274
        %v727 = vpop.f32.mrf.mxu0
        %v728 = vadd.f32 %v594, %v727
        %v729 = vpop.f32.mrf.mxu0
        %v730 = vadd.f32 %v598, %v729
        %731 = vmatprep.mubr.f32.mxu0 %v277
        %732 = vmatmul.mubr.f32.gmra.mxu0 %v276
        %v733 = vpop.f32.mrf.mxu0
        %v734 = vadd.f32 %v594, %v733
        %v735 = vpop.f32.mrf.mxu0
        %v736 = vadd.f32 %v598, %v735
        %737 = vmatprep.mubr.f32.mxu0 %v279
        %738 = vmatmul.mubr.f32.gmra.mxu0 %v278
        %v739 = vpop.f32.mrf.mxu0
        %v740 = vadd.f32 %v594, %v739
        %v741 = vpop.f32.mrf.mxu0
        %v742 = vadd.f32 %v598, %v741
        %743 = vmatprep.mubr.f32.mxu0 %v281
        %744 = vmatmul.mubr.f32.gmra.mxu0 %v280
        %v745 = vpop.f32.mrf.mxu0
        %v746 = vadd.f32 %v594, %v745
        %v747 = vpop.f32.mrf.mxu0
        %v748 = vadd.f32 %v598, %v747
        %749 = vmatprep.mubr.f32.mxu0 %v283
        %750 = vmatmul.mubr.f32.gmra.mxu0 %v282
        %v751 = vpop.f32.mrf.mxu0
        %v752 = vadd.f32 %v594, %v751
        %v753 = vpop.f32.mrf.mxu0
        %v754 = vadd.f32 %v598, %v753
        %755 = vmatprep.mubr.f32.mxu0 %v285
        %756 = vmatmul.mubr.f32.gmra.mxu0 %v284
        %v757 = vpop.f32.mrf.mxu0
        %v758 = vadd.f32 %v594, %v757
        %v759 = vpop.f32.mrf.mxu0
        %v760 = vadd.f32 %v598, %v759
        %761 = vdwg.mxu0
        %v762 = vmax.f32 %v429, %v668
        %v763 = vmax.f32 %v431, %v670
        %v764 = vmax.f32 %v435, %v674
        %v765 = vmax.f32 %v437, %v676
        %v766 = vmax.f32 %v441, %v680
        %v767 = vmax.f32 %v443, %v682
        %v768 = vmax.f32 %v447, %v686
        %v769 = vmax.f32 %v449, %v688
        %v770 = vmax.f32 %v453, %v692
        %v771 = vmax.f32 %v455, %v694
        %v772 = vmax.f32 %v459, %v698
        %v773 = vmax.f32 %v461, %v700
        %v774 = vmax.f32 %v465, %v704
        %v775 = vmax.f32 %v467, %v706
        %v776 = vmax.f32 %v471, %v710
        %v777 = vmax.f32 %v473, %v712
        %v778 = vmax.f32 %v477, %v716
        %v779 = vmax.f32 %v479, %v718
        %v780 = vmax.f32 %v483, %v722
        %v781 = vmax.f32 %v485, %v724
        %v782 = vmax.f32 %v489, %v728
        %v783 = vmax.f32 %v491, %v730
        %v784 = vmax.f32 %v495, %v734
        %v785 = vmax.f32 %v497, %v736
        %v786 = vmax.f32 %v501, %v740
        %v787 = vmax.f32 %v503, %v742
        %v788 = vmax.f32 %v507, %v746
        %v789 = vmax.f32 %v509, %v748
        %v790 = vmax.f32 %v513, %v752
        %v791 = vmax.f32 %v515, %v754
        %v792 = vmax.f32 %v519, %v758
        %v793 = vmax.f32 %v521, %v760
        %794 = vst [vmem:[%s248] sm:$0xff] %v762
        %795 = vst [vmem:[%s248 + $0x8] sm:$0xff] %v763
        %796 = vst [vmem:[%s248 + $0x10] sm:$0xff] %v764
        %797 = vst [vmem:[%s248 + $0x18] sm:$0xff] %v765
        %798 = vst [vmem:[%s248 + $0x20] sm:$0xff] %v766
        %799 = vst [vmem:[%s248 + $0x28] sm:$0xff] %v767
        %800 = vst [vmem:[%s248 + $0x30] sm:$0xff] %v768
        %801 = vst [vmem:[%s248 + $0x38] sm:$0xff] %v769
        %802 = vst [vmem:[%s248 + $0x40] sm:$0xff] %v770
        %803 = vst [vmem:[%s248 + $0x48] sm:$0xff] %v771
        %804 = vst [vmem:[%s248 + $0x50] sm:$0xff] %v772
        %805 = vst [vmem:[%s248 + $0x58] sm:$0xff] %v773
        %806 = vst [vmem:[%s248 + $0x60] sm:$0xff] %v774
        %807 = vst [vmem:[%s248 + $0x68] sm:$0xff] %v775
        %808 = vst [vmem:[%s248 + $0x70] sm:$0xff] %v776
        %809 = vst [vmem:[%s248 + $0x78] sm:$0xff] %v777
        %810 = vst [vmem:[%s248 + $0x80] sm:$0xff] %v778
        %811 = vst [vmem:[%s248 + $0x88] sm:$0xff] %v779
        %812 = vst [vmem:[%s248 + $0x90] sm:$0xff] %v780
        %813 = vst [vmem:[%s248 + $0x98] sm:$0xff] %v781
        %814 = vst [vmem:[%s248 + $0xa0] sm:$0xff] %v782
        %815 = vst [vmem:[%s248 + $0xa8] sm:$0xff] %v783
        %816 = vst [vmem:[%s248 + $0xb0] sm:$0xff] %v784
        %817 = vst [vmem:[%s248 + $0xb8] sm:$0xff] %v785
        %818 = vst [vmem:[%s248 + $0xc0] sm:$0xff] %v786
        %819 = vst [vmem:[%s248 + $0xc8] sm:$0xff] %v787
        %820 = vst [vmem:[%s248 + $0xd0] sm:$0xff] %v788
        %821 = vst [vmem:[%s248 + $0xd8] sm:$0xff] %v789
        %822 = vst [vmem:[%s248 + $0xe0] sm:$0xff] %v790
        %823 = vst [vmem:[%s248 + $0xe8] sm:$0xff] %v791
        %824 = vst [vmem:[%s248 + $0xf0] sm:$0xff] %v792
        %825 = vst [vmem:[%s248 + $0xf8] sm:$0xff] %v793
        %s826 = sand.u32 %s121, 1
        %s827 = scalar_lea.sflag [#allocation4], %s826
        %s828 = sand.u32 %s121, 1
        %s829 = smul.addr %s828, 256
        %s830 = scalar_lea.vmem [#allocation8], %s829
        // Predicated region
        $region45: #{maxout_forward.1} parent=31 // pred_check
          %p831 = pneg %p131
        $region46: #{maxout_forward.1} parent=31 // pred_check_branch
          %833 = sbr.rel (%p831) target = $region48
        $region47: #{maxout_forward.1} parent=31 // pred_region
          %s834 = smul.u32 16, %s25
          %s835 = smul.u32 2, %s26
          %s837 = ssub.s32 4096, 4096
          %838 = vsyncadd %s827, %s837
          %s839 = smul.addr %s834, 2
          %s840 = sadd.s32 %s835, %s839
          %s841 = smul.addr %s840, 128
          %s842 = scalar_lea.hbm %s3, %s841
          %s843 = sshll.u32 %s830, 4
          %s844 = int_to_ptr.vmem [resolvable:$true] %s843
          %849 = dma.vmem_to_hbm [thread:$0]  %s844, 4096, %s842, %s827, 256, 256, 16
        $region48: #{maxout_forward.1} parent=31 // pred_fallthru
          _
      $region32: #{maxout_forward.1} parent=5 // pred_fallthru
        _
      %p850 = scmp.le.s32.totalorder 2, %s16
      // Predicated region
      $region49: #{maxout_forward.1} parent=5 // pred_check
        %p851 = pneg %p850
      $region50: #{maxout_forward.1} parent=5 // pred_check_branch
        %853 = sbr.rel (%p851) target = $region52
      $region51: #{maxout_forward.1} parent=5 // pred_region
        %s854 = ssub.s32 %s16, 2
        // Predicated region
        $region53: #{maxout_forward.1} parent=51 // pred_check
          %p855 = pneg %p137
        $region54: #{maxout_forward.1} parent=51 // pred_check_branch
          %857 = sbr.rel (%p855) target = $region56
        $region55: #{maxout_forward.1} parent=51 // pred_region
          %s858 = sand.u32 %s122, 1
          %s859 = scalar_lea.sflag [#allocation4], %s858
          %s860 = sand.u32 %s122, 1
          %s861 = smul.addr %s860, 256
          %s862 = scalar_lea.vmem [#allocation8], %s861
          %863 = dma.done %s859, 4096
        $region56: #{maxout_forward.1} parent=51 // pred_fallthru
          _
      $region52: #{maxout_forward.1} parent=5 // pred_fallthru
        _
    $region6: #{maxout_forward.1} parent=1 // loop_footer
      %s20 = sadd.s32 1, %s16
    $region7: #{maxout_forward.1} parent=1 // loop_footer_branch
      %15 = sbr.rel target = $region3
    $region8: #{maxout_forward.1} parent=1 // loop_exit
      _
    %864 = vsyncpa [#allocation3], 1
    %s865 = scalar_lea.sflag [#allocation3], 1
    %866 = vsyncpa %s865, 1
    %867 = vsyncpa [#allocation6], 1
    %868 = vsyncpa [#allocation4], 1
    %s869 = scalar_lea.sflag [#allocation4], 1
    %870 = vsyncpa %s869, 1

</llo_original>
